<compile_context>
chip_gen: v5e
topology: v5e:2x2
jax: 0.10.0
libtpu: 0.0.40
codegen_flags: <defaults>
</compile_context>

<pallas_src>
import functools

import jax
import jax.numpy as jnp
from jax.experimental import pallas as pl
from jax.experimental.pallas import tpu as pltpu

IN_FEATS = 32 * 32 * 3   # 3072
H1, H2, OUT = 120, 84, 10
PAD = 128                # lane-padded hidden width
TILE_B = 512             # batch rows per grid step (capped for tiny batches)


def _boringnet_kernel(x_ref, w1_ref, b1_ref, w2_ref, b2_ref, w3_ref, b3_ref,
                      o_ref):
    # x_ref: (tb, 3072); w*: (in_pad, 128); b*: (1, 128); o_ref: (tb, 128)
    x = x_ref[...]

    h1 = jnp.dot(x, w1_ref[...], preferred_element_type=jnp.float32)
    h1 = jnp.maximum(h1 + b1_ref[...], 0.0)

    h2 = jnp.dot(h1, w2_ref[...], preferred_element_type=jnp.float32)
    h2 = jnp.maximum(h2 + b2_ref[...], 0.0)

    h3 = jnp.dot(h2, w3_ref[...], preferred_element_type=jnp.float32)
    o_ref[...] = h3 + b3_ref[...]


def prepare_params(params):
    """One-time lane-padding of weights/biases to 128 (hoisted out of forward).

    Zero-padded lanes stay inert through ReLU and subsequent matmuls."""
    w1, b1, w2, b2, w3, b3 = params
    w1p = jnp.pad(w1, ((0, 0), (0, PAD - H1)))             # (3072, 128)
    b1p = jnp.pad(b1, ((0, PAD - H1),)).reshape(1, PAD)
    w2p = jnp.pad(w2, ((0, PAD - H1), (0, PAD - H2)))      # (128, 128)
    b2p = jnp.pad(b2, ((0, PAD - H2),)).reshape(1, PAD)
    w3p = jnp.pad(w3, ((0, PAD - H2), (0, PAD - OUT)))     # (128, 128)
    b3p = jnp.pad(b3, ((0, PAD - OUT),)).reshape(1, PAD)
    return (w1p, b1p, w2p, b2p, w3p, b3p)


@jax.jit
def boringnet_forward(x, padded_params):
    """x: (B, 3, 32, 32) float32 (NCHW). padded_params: from prepare_params.
    Returns (B, 10) float32."""
    w1p, b1p, w2p, b2p, w3p, b3p = padded_params
    B = x.shape[0]
    x_flat = x.reshape(-1, IN_FEATS)                       # == torch .view(-1, 3072)

    # Batch tile: multiple of 8 sublanes, capped at TILE_B, no HBM pad of x;
    # the partial last grid block is handled by Pallas (rows are independent).
    tb = min(TILE_B, max(8, ((B + 7) // 8) * 8))
    grid = (pl.cdiv(B, tb),)

    resident = lambda shape: pl.BlockSpec(shape, lambda i: (0, 0))

    out_pad = pl.pallas_call(
        _boringnet_kernel,
        out_shape=jax.ShapeDtypeStruct((B, PAD), jnp.float32),
        grid=grid,
        in_specs=[
            pl.BlockSpec((tb, IN_FEATS), lambda i: (i, 0)),   # x: streamed over batch
            resident((IN_FEATS, PAD)), resident((1, PAD)),    # w1, b1 (VMEM-resident)
            resident((PAD, PAD)), resident((1, PAD)),         # w2, b2
            resident((PAD, PAD)), resident((1, PAD)),         # w3, b3
        ],
        out_specs=pl.BlockSpec((tb, PAD), lambda i: (i, 0)),
        compiler_params=pltpu.CompilerParams(
            dimension_semantics=("parallel",),                # megacore on v7x
            vmem_limit_bytes=32 << 20,                        # ~16 MiB needed at tb=512
        ),
    )(x_flat, w1p, b1p, w2p, b2p, w3p, b3p)

    return out_pad[:, :OUT]


def init_params(key):
    """Deterministic init matching nn.Linear shapes (weights stored (in, out))."""
    ks = jax.random.split(key, 6)

    def lin(kw, kb, fan_in, fan_out):
        bound = 1.0 / jnp.sqrt(fan_in)
        w = jax.random.uniform(kw, (fan_in, fan_out), jnp.float32, -bound, bound)
        b = jax.random.uniform(kb, (fan_out,), jnp.float32, -bound, bound)
        return w, b

    w1, b1 = lin(ks[0], ks[1], IN_FEATS, H1)
    w2, b2 = lin(ks[2], ks[3], H1, H2)
    w3, b3 = lin(ks[4], ks[5], H2, OUT)
    return (w1, b1, w2, b2, w3, b3)


if __name__ == "__main__":
    key = jax.random.PRNGKey(0)
    k_in, k_par = jax.random.split(key)

    params = init_params(k_par)
    padded_params = prepare_params(params)                  # pad once, not per call
    x = jax.random.normal(k_in, (2, 3, 32, 32), jnp.float32)  # NCHW, like CIFAR

    out = boringnet_forward(x, padded_params)
    jax.block_until_ready(out)

    # reference check in plain JAX
    w1, b1, w2, b2, w3, b3 = params
    xf = x.reshape(-1, IN_FEATS)
    ref = jnp.maximum(xf @ w1 + b1, 0.0)
    ref = jnp.maximum(ref @ w2 + b2, 0.0)
    ref = ref @ w3 + b3
    assert out.shape == (2, OUT)
    assert jnp.allclose(out, ref, atol=1e-4, rtol=1e-4)

    print("KERNEL_OK")
</pallas_src>

<mosaic_0001>
module attributes {stable_mosaic.version = 11 : i64} {
  func.func @_boringnet_kernel(%arg0: i32, %arg1: memref<8x3072xf32, #tpu.memory_space<vmem>>, %arg2: memref<3072x128xf32, #tpu.memory_space<vmem>>, %arg3: memref<1x128xf32, #tpu.memory_space<vmem>>, %arg4: memref<128x128xf32, #tpu.memory_space<vmem>>, %arg5: memref<1x128xf32, #tpu.memory_space<vmem>>, %arg6: memref<128x128xf32, #tpu.memory_space<vmem>>, %arg7: memref<1x128xf32, #tpu.memory_space<vmem>>, %arg8: memref<8x128xf32, #tpu.memory_space<vmem>>) attributes {dimension_semantics = [#tpu.dimension_semantics<parallel>], iteration_bounds = array<i64: 1>, scalar_prefetch = 0 : i64, scratch_operands = 0 : i64, tpu.core_type = #tpu.core_type<tc>, window_params = [{transform_indices = @transform_0, window_bounds = array<i64: 8, 3072>}, {pipeline_mode = #tpu.pipeline_mode<synchronous>, transform_indices = @transform_1, window_bounds = array<i64: 3072, 128>}, {pipeline_mode = #tpu.pipeline_mode<synchronous>, transform_indices = @transform_2, window_bounds = array<i64: 1, 128>}, {pipeline_mode = #tpu.pipeline_mode<synchronous>, transform_indices = @transform_3, window_bounds = array<i64: 128, 128>}, {pipeline_mode = #tpu.pipeline_mode<synchronous>, transform_indices = @transform_4, window_bounds = array<i64: 1, 128>}, {pipeline_mode = #tpu.pipeline_mode<synchronous>, transform_indices = @transform_5, window_bounds = array<i64: 128, 128>}, {pipeline_mode = #tpu.pipeline_mode<synchronous>, transform_indices = @transform_6, window_bounds = array<i64: 1, 128>}, {transform_indices = @transform_7, window_bounds = array<i64: 8, 128>}]} {
    %c0 = arith.constant 0 : index
    %c0_0 = arith.constant 0 : index
    %0 = vector.load %arg1[%c0, %c0_0] : memref<8x3072xf32, #tpu.memory_space<vmem>>, vector<8x3072xf32>
    %c0_1 = arith.constant 0 : index
    %c0_2 = arith.constant 0 : index
    %1 = vector.load %arg2[%c0_1, %c0_2] : memref<3072x128xf32, #tpu.memory_space<vmem>>, vector<3072x128xf32>
    %cst = arith.constant dense<0.000000e+00> : vector<8x128xf32>
    %2 = tpu.matmul %0, %1, %cst {dimension_numbers = #tpu.dot_dimension_numbers<[1], [0], [0], [1], [0, 0, 1, 1], [], []>} : vector<8x3072xf32>, vector<3072x128xf32>, vector<8x128xf32> -> vector<8x128xf32>
    %c0_3 = arith.constant 0 : index
    %c0_4 = arith.constant 0 : index
    %3 = vector.load %arg3[%c0_3, %c0_4] : memref<1x128xf32, #tpu.memory_space<vmem>>, vector<1x128xf32>
    %4 = vector.broadcast %3 : vector<1x128xf32> to vector<8x128xf32>
    %5 = arith.addf %2, %4 : vector<8x128xf32>
    %cst_5 = arith.constant 0.000000e+00 : f32
    %6 = vector.broadcast %cst_5 : f32 to vector<8x128xf32>
    %7 = arith.maximumf %5, %6 : vector<8x128xf32>
    %c0_6 = arith.constant 0 : index
    %c0_7 = arith.constant 0 : index
    %8 = vector.load %arg4[%c0_6, %c0_7] : memref<128x128xf32, #tpu.memory_space<vmem>>, vector<128x128xf32>
    %cst_8 = arith.constant dense<0.000000e+00> : vector<8x128xf32>
    %9 = tpu.matmul %7, %8, %cst_8 {dimension_numbers = #tpu.dot_dimension_numbers<[1], [0], [0], [1], [0, 0, 1, 1], [], []>} : vector<8x128xf32>, vector<128x128xf32>, vector<8x128xf32> -> vector<8x128xf32>
    %c0_9 = arith.constant 0 : index
    %c0_10 = arith.constant 0 : index
    %10 = vector.load %arg5[%c0_9, %c0_10] : memref<1x128xf32, #tpu.memory_space<vmem>>, vector<1x128xf32>
    %11 = vector.broadcast %10 : vector<1x128xf32> to vector<8x128xf32>
    %12 = arith.addf %9, %11 : vector<8x128xf32>
    %cst_11 = arith.constant 0.000000e+00 : f32
    %13 = vector.broadcast %cst_11 : f32 to vector<8x128xf32>
    %14 = arith.maximumf %12, %13 : vector<8x128xf32>
    %c0_12 = arith.constant 0 : index
    %c0_13 = arith.constant 0 : index
    %15 = vector.load %arg6[%c0_12, %c0_13] : memref<128x128xf32, #tpu.memory_space<vmem>>, vector<128x128xf32>
    %cst_14 = arith.constant dense<0.000000e+00> : vector<8x128xf32>
    %16 = tpu.matmul %14, %15, %cst_14 {dimension_numbers = #tpu.dot_dimension_numbers<[1], [0], [0], [1], [0, 0, 1, 1], [], []>} : vector<8x128xf32>, vector<128x128xf32>, vector<8x128xf32> -> vector<8x128xf32>
    %c0_15 = arith.constant 0 : index
    %c0_16 = arith.constant 0 : index
    %17 = vector.load %arg7[%c0_15, %c0_16] : memref<1x128xf32, #tpu.memory_space<vmem>>, vector<1x128xf32>
    %18 = vector.broadcast %17 : vector<1x128xf32> to vector<8x128xf32>
    %19 = arith.addf %16, %18 : vector<8x128xf32>
    %c0_17 = arith.constant 0 : index
    %c0_18 = arith.constant 0 : index
    %20 = vector.load %arg8[%c0_17, %c0_18] : memref<8x128xf32, #tpu.memory_space<vmem>>, vector<8x128xf32>
    tpu.vector_store %arg8[%c0_17, %c0_18], %19 {strides = array<i32>} : memref<8x128xf32, #tpu.memory_space<vmem>>, vector<8x128xf32>,
    return
  }
  func.func @transform_0(%arg0: i32) -> (i32, i32) {
    %c0_i32 = arith.constant 0 : i32
    %c0_i32_0 = arith.constant 0 : i32
    return %arg0, %c0_i32 : i32, i32
  }
  func.func @transform_1(%arg0: i32) -> (i32, i32) {
    %c0_i32 = arith.constant 0 : i32
    %c0_i32_0 = arith.constant 0 : i32
    %c0_i32_1 = arith.constant 0 : i32
    return %c0_i32, %c0_i32_0 : i32, i32
  }
  func.func @transform_2(%arg0: i32) -> (i32, i32) {
    %c0_i32 = arith.constant 0 : i32
    %c0_i32_0 = arith.constant 0 : i32
    %c0_i32_1 = arith.constant 0 : i32
    return %c0_i32, %c0_i32_0 : i32, i32
  }
  func.func @transform_3(%arg0: i32) -> (i32, i32) {
    %c0_i32 = arith.constant 0 : i32
    %c0_i32_0 = arith.constant 0 : i32
    %c0_i32_1 = arith.constant 0 : i32
    return %c0_i32, %c0_i32_0 : i32, i32
  }
  func.func @transform_4(%arg0: i32) -> (i32, i32) {
    %c0_i32 = arith.constant 0 : i32
    %c0_i32_0 = arith.constant 0 : i32
    %c0_i32_1 = arith.constant 0 : i32
    return %c0_i32, %c0_i32_0 : i32, i32
  }
  func.func @transform_5(%arg0: i32) -> (i32, i32) {
    %c0_i32 = arith.constant 0 : i32
    %c0_i32_0 = arith.constant 0 : i32
    %c0_i32_1 = arith.constant 0 : i32
    return %c0_i32, %c0_i32_0 : i32, i32
  }
  func.func @transform_6(%arg0: i32) -> (i32, i32) {
    %c0_i32 = arith.constant 0 : i32
    %c0_i32_0 = arith.constant 0 : i32
    %c0_i32_1 = arith.constant 0 : i32
    return %c0_i32, %c0_i32_0 : i32, i32
  }
  func.func @transform_7(%arg0: i32) -> (i32, i32) {
    %c0_i32 = arith.constant 0 : i32
    %c0_i32_0 = arith.constant 0 : i32
    return %arg0, %c0_i32 : i32, i32
  }
}

</mosaic_0001>

<llo_original>
// kernel: boringnet_forward.1
$region0: #{boringnet_forward.1}
  #allocation0 [shape = 'u32[]', space=smem, size = 0x4, offset = 0x4, fixed_abs, tag = 'smem constant byte address 0x4 - core index']
  #allocation1 [shape = 'u32[72,128]{1,0:T(1,128)}', space=vmem, size = 0x9000, scoped, tag = 'internal scratch']
  %s0 = inlined_call_operand.vmem [shape: f32[2,3072], index: 0, kind: input, shape index: {}]
  %s1 = inlined_call_operand.hbm [shape: f32[3072,128], index: 1, kind: input, shape index: {}]
  %s2 = inlined_call_operand.hbm [shape: f32[1,128], index: 2, kind: input, shape index: {}]
  %s3 = inlined_call_operand.hbm [shape: f32[128,128], index: 3, kind: input, shape index: {}]
  %s4 = inlined_call_operand.hbm [shape: f32[1,128], index: 4, kind: input, shape index: {}]
  %s5 = inlined_call_operand.hbm [shape: f32[128,128], index: 5, kind: input, shape index: {}]
  %s6 = inlined_call_operand.hbm [shape: f32[1,128], index: 6, kind: input, shape index: {}]
  %s7 = inlined_call_operand.hbm [shape: f32[2,128], index: 7, kind: output, shape index: {}]
  %s8 = sld [smem:[#allocation0]]
  $region62: #{boringnet_forward.1} parent=0
    _
  %s10 = ssub.s32 1, %s8
  %s11 = scalar_select 0, %s10, %s8
  $region1: #{boringnet_forward.1} parent=0
    #allocation2 [shape = 'u8[1572864]{0}', space=vmem, size = 0x180000, scoped, tag = 'input window, operand 1, single buffered']
    #allocation3 [shape = 's32[1]{0}', space=sflag, size = 0x4, scoped, tag = 'scoped memory for boringnet_forward.1']
    #allocation4 [shape = 's32[1]{0}', space=sflag, size = 0x4, scoped, tag = 'scoped memory for boringnet_forward.1']
    #allocation5 [shape = 'u8[512]{0}', space=vmem, size = 0x400, scoped, tag = 'input window, operand 2, single buffered']
    #allocation6 [shape = 's32[1]{0}', space=sflag, size = 0x4, scoped, tag = 'scoped memory for boringnet_forward.1']
    #allocation7 [shape = 'u8[65536]{0}', space=vmem, size = 0x10000, scoped, tag = 'input window, operand 3, single buffered']
    #allocation8 [shape = 'u8[512]{0}', space=vmem, size = 0x400, scoped, tag = 'input window, operand 4, single buffered']
    #allocation9 [shape = 's32[1]{0}', space=sflag, size = 0x4, scoped, tag = 'scoped memory for boringnet_forward.1']
    #allocation10 [shape = 'u8[65536]{0}', space=vmem, size = 0x10000, scoped, tag = 'input window, operand 5, single buffered']
    #allocation11 [shape = 'u8[512]{0}', space=vmem, size = 0x400, scoped, tag = 'input window, operand 6, single buffered']
    #allocation12 [shape = 's32[1]{0}', space=sflag, size = 0x4, scoped, tag = 'scoped memory for boringnet_forward.1']
    #allocation13 [shape = 'u8[4096]{0}', space=vmem, size = 0x1000, scoped, tag = 'output window, operand 0, single buffered']
    %12 = vsyncpa [#allocation3], 0
    %13 = vsyncpa [#allocation6], 0
    %14 = vsyncpa [#allocation9], 0
    %15 = vsyncpa [#allocation12], 0
    %16 = vsyncpa [#allocation4], 0
    // Predicated region
    $region2: #{boringnet_forward.1} parent=1 // pred_check
      _
    $region3: #{boringnet_forward.1} parent=1 // pred_check_branch
      %18 = sbr.rel (0) target = $region5
    $region4: #{boringnet_forward.1} parent=1 // pred_region
      _
    $region5: #{boringnet_forward.1} parent=1 // pred_fallthru
      _
    // Predicated region
    $region6: #{boringnet_forward.1} parent=1 // pred_check
      _
    $region7: #{boringnet_forward.1} parent=1 // pred_check_branch
      %20 = sbr.rel (0) target = $region9
    $region8: #{boringnet_forward.1} parent=1 // pred_region
      %22 = vsyncadd [#allocation3], 0
      %s23 = sshll.u32 %s1, 4
      %s24 = int_to_ptr.hbm [resolvable:$true] %s23
      %s25 = sshll.u32 [#allocation2], 4
      %s26 = int_to_ptr.vmem [resolvable:$true] %s25
      %31 = dma.hbm_to_vmem [thread:$0]  %s24, 49152, %s26, [#allocation3], 128, 128, 8
    $region9: #{boringnet_forward.1} parent=1 // pred_fallthru
      _
    // Predicated region
    $region10: #{boringnet_forward.1} parent=1 // pred_check
      _
    $region11: #{boringnet_forward.1} parent=1 // pred_check_branch
      %33 = sbr.rel (0) target = $region13
    $region12: #{boringnet_forward.1} parent=1 // pred_region
      %35 = vsyncadd [#allocation6], 0
      %s37 = sshll.u32 %s2, 4
      %s38 = int_to_ptr.hbm [resolvable:$true] %s37
      %s39 = sshll.u32 [#allocation5], 4
      %s40 = int_to_ptr.vmem [resolvable:$true] %s39
      %42 = dma.hbm_to_vmem [thread:$0]  %s38, 16, %s40, [#allocation6]
    $region13: #{boringnet_forward.1} parent=1 // pred_fallthru
      _
    // Predicated region
    $region14: #{boringnet_forward.1} parent=1 // pred_check
      _
    $region15: #{boringnet_forward.1} parent=1 // pred_check_branch
      %44 = sbr.rel (0) target = $region17
    $region16: #{boringnet_forward.1} parent=1 // pred_region
      %46 = vsyncadd [#allocation6], 0
      %s47 = sshll.u32 %s3, 4
      %s48 = int_to_ptr.hbm [resolvable:$true] %s47
      %s49 = sshll.u32 [#allocation7], 4
      %s50 = int_to_ptr.vmem [resolvable:$true] %s49
      %55 = dma.hbm_to_vmem [thread:$0]  %s48, 2048, %s50, [#allocation6], 128, 128, 8
    $region17: #{boringnet_forward.1} parent=1 // pred_fallthru
      _
    // Predicated region
    $region18: #{boringnet_forward.1} parent=1 // pred_check
      _
    $region19: #{boringnet_forward.1} parent=1 // pred_check_branch
      %57 = sbr.rel (0) target = $region21
    $region20: #{boringnet_forward.1} parent=1 // pred_region
      %59 = vsyncadd [#allocation9], 0
      %s61 = sshll.u32 %s4, 4
      %s62 = int_to_ptr.hbm [resolvable:$true] %s61
      %s63 = sshll.u32 [#allocation8], 4
      %s64 = int_to_ptr.vmem [resolvable:$true] %s63
      %66 = dma.hbm_to_vmem [thread:$0]  %s62, 16, %s64, [#allocation9]
    $region21: #{boringnet_forward.1} parent=1 // pred_fallthru
      _
    // Predicated region
    $region22: #{boringnet_forward.1} parent=1 // pred_check
      _
    $region23: #{boringnet_forward.1} parent=1 // pred_check_branch
      %68 = sbr.rel (0) target = $region25
    $region24: #{boringnet_forward.1} parent=1 // pred_region
      %70 = vsyncadd [#allocation9], 0
      %s71 = sshll.u32 %s5, 4
      %s72 = int_to_ptr.hbm [resolvable:$true] %s71
      %s73 = sshll.u32 [#allocation10], 4
      %s74 = int_to_ptr.vmem [resolvable:$true] %s73
      %79 = dma.hbm_to_vmem [thread:$0]  %s72, 2048, %s74, [#allocation9], 128, 128, 8
    $region25: #{boringnet_forward.1} parent=1 // pred_fallthru
      _
    // Predicated region
    $region26: #{boringnet_forward.1} parent=1 // pred_check
      _
    $region27: #{boringnet_forward.1} parent=1 // pred_check_branch
      %81 = sbr.rel (0) target = $region29
    $region28: #{boringnet_forward.1} parent=1 // pred_region
      %83 = vsyncadd [#allocation12], 0
      %s85 = sshll.u32 %s6, 4
      %s86 = int_to_ptr.hbm [resolvable:$true] %s85
      %s87 = sshll.u32 [#allocation11], 4
      %s88 = int_to_ptr.vmem [resolvable:$true] %s87
      %90 = dma.hbm_to_vmem [thread:$0]  %s86, 16, %s88, [#allocation12]
    $region29: #{boringnet_forward.1} parent=1 // pred_fallthru
      _
    // Predicated region
    $region30: #{boringnet_forward.1} parent=1 // pred_check
      _
    $region31: #{boringnet_forward.1} parent=1 // pred_check_branch
      %92 = sbr.rel (0) target = $region33
    $region32: #{boringnet_forward.1} parent=1 // pred_region
      %94 = dma.done [#allocation3], 49152
    $region33: #{boringnet_forward.1} parent=1 // pred_fallthru
      _
    // Predicated region
    $region34: #{boringnet_forward.1} parent=1 // pred_check
      _
    $region35: #{boringnet_forward.1} parent=1 // pred_check_branch
      %96 = sbr.rel (0) target = $region37
    $region36: #{boringnet_forward.1} parent=1 // pred_region
      %98 = dma.done [#allocation6], 16
    $region37: #{boringnet_forward.1} parent=1 // pred_fallthru
      _
    // Predicated region
    $region38: #{boringnet_forward.1} parent=1 // pred_check
      _
    $region39: #{boringnet_forward.1} parent=1 // pred_check_branch
      %100 = sbr.rel (0) target = $region41
    $region40: #{boringnet_forward.1} parent=1 // pred_region
      %102 = dma.done [#allocation6], 2048
    $region41: #{boringnet_forward.1} parent=1 // pred_fallthru
      _
    // Predicated region
    $region42: #{boringnet_forward.1} parent=1 // pred_check
      _
    $region43: #{boringnet_forward.1} parent=1 // pred_check_branch
      %104 = sbr.rel (0) target = $region45
    $region44: #{boringnet_forward.1} parent=1 // pred_region
      %106 = dma.done [#allocation9], 16
    $region45: #{boringnet_forward.1} parent=1 // pred_fallthru
      _
    // Predicated region
    $region46: #{boringnet_forward.1} parent=1 // pred_check
      _
    $region47: #{boringnet_forward.1} parent=1 // pred_check_branch
      %108 = sbr.rel (0) target = $region49
    $region48: #{boringnet_forward.1} parent=1 // pred_region
      %110 = dma.done [#allocation9], 2048
    $region49: #{boringnet_forward.1} parent=1 // pred_fallthru
      _
    // Predicated region
    $region50: #{boringnet_forward.1} parent=1 // pred_check
      _
    $region51: #{boringnet_forward.1} parent=1 // pred_check_branch
      %112 = sbr.rel (0) target = $region53
    $region52: #{boringnet_forward.1} parent=1 // pred_region
      %114 = dma.done [#allocation12], 16
    $region53: #{boringnet_forward.1} parent=1 // pred_fallthru
      _
    %v115 = vld [vmem:[%s0] sm:$0xff]
    %v116 = vld [vmem:[%s0 + $0x8] sm:$0xff]
    %v117 = vld [vmem:[%s0 + $0x10] sm:$0xff]
    %v118 = vld [vmem:[%s0 + $0x18] sm:$0xff]
    %v119 = vld [vmem:[%s0 + $0x20] sm:$0xff]
    %v120 = vld [vmem:[%s0 + $0x28] sm:$0xff]
    %v121 = vld [vmem:[%s0 + $0x30] sm:$0xff]
    %v122 = vld [vmem:[%s0 + $0x38] sm:$0xff]
    %v123 = vld [vmem:[%s0 + $0x40] sm:$0xff]
    %v124 = vld [vmem:[%s0 + $0x48] sm:$0xff]
    %v125 = vld [vmem:[%s0 + $0x50] sm:$0xff]
    %v126 = vld [vmem:[%s0 + $0x58] sm:$0xff]
    %v127 = vld [vmem:[%s0 + $0x60] sm:$0xff]
    %v128 = vld [vmem:[%s0 + $0x68] sm:$0xff]
    %v129 = vld [vmem:[%s0 + $0x70] sm:$0xff]
    %v130 = vld [vmem:[%s0 + $0x78] sm:$0xff]
    %v131 = vld [vmem:[%s0 + $0x80] sm:$0xff]
    %v132 = vld [vmem:[%s0 + $0x88] sm:$0xff]
    %v133 = vld [vmem:[%s0 + $0x90] sm:$0xff]
    %v134 = vld [vmem:[%s0 + $0x98] sm:$0xff]
    %v135 = vld [vmem:[%s0 + $0xa0] sm:$0xff]
    %v136 = vld [vmem:[%s0 + $0xa8] sm:$0xff]
    %v137 = vld [vmem:[%s0 + $0xb0] sm:$0xff]
    %v138 = vld [vmem:[%s0 + $0xb8] sm:$0xff]
    %v139 = vld [vmem:[#allocation2] sm:$0xff]
    %v140 = vld [vmem:[#allocation2 + $0x8] sm:$0xff]
    %v141 = vld [vmem:[#allocation2 + $0x10] sm:$0xff]
    %v142 = vld [vmem:[#allocation2 + $0x18] sm:$0xff]
    %v143 = vld [vmem:[#allocation2 + $0x20] sm:$0xff]
    %v144 = vld [vmem:[#allocation2 + $0x28] sm:$0xff]
    %v145 = vld [vmem:[#allocation2 + $0x30] sm:$0xff]
    %v146 = vld [vmem:[#allocation2 + $0x38] sm:$0xff]
    %v147 = vld [vmem:[#allocation2 + $0x40] sm:$0xff]
    %v148 = vld [vmem:[#allocation2 + $0x48] sm:$0xff]
    %v149 = vld [vmem:[#allocation2 + $0x50] sm:$0xff]
    %v150 = vld [vmem:[#allocation2 + $0x58] sm:$0xff]
    %v151 = vld [vmem:[#allocation2 + $0x60] sm:$0xff]
    %v152 = vld [vmem:[#allocation2 + $0x68] sm:$0xff]
    %v153 = vld [vmem:[#allocation2 + $0x70] sm:$0xff]
    %v154 = vld [vmem:[#allocation2 + $0x78] sm:$0xff]
    %v155 = vld [vmem:[#allocation2 + $0x80] sm:$0xff]
    %v156 = vld [vmem:[#allocation2 + $0x88] sm:$0xff]
    %v157 = vld [vmem:[#allocation2 + $0x90] sm:$0xff]
    %v158 = vld [vmem:[#allocation2 + $0x98] sm:$0xff]
    %v159 = vld [vmem:[#allocation2 + $0xa0] sm:$0xff]
    %v160 = vld [vmem:[#allocation2 + $0xa8] sm:$0xff]
    %v161 = vld [vmem:[#allocation2 + $0xb0] sm:$0xff]
    %v162 = vld [vmem:[#allocation2 + $0xb8] sm:$0xff]
    %v163 = vld [vmem:[#allocation2 + $0xc0] sm:$0xff]
    %v164 = vld [vmem:[#allocation2 + $0xc8] sm:$0xff]
    %v165 = vld [vmem:[#allocation2 + $0xd0] sm:$0xff]
    %v166 = vld [vmem:[#allocation2 + $0xd8] sm:$0xff]
    %v167 = vld [vmem:[#allocation2 + $0xe0] sm:$0xff]
    %v168 = vld [vmem:[#allocation2 + $0xe8] sm:$0xff]
    %v169 = vld [vmem:[#allocation2 + $0xf0] sm:$0xff]
    %v170 = vld [vmem:[#allocation2 + $0xf8] sm:$0xff]
    %v171 = vld [vmem:[#allocation2 + $0x100] sm:$0xff]
    %v172 = vld [vmem:[#allocation2 + $0x108] sm:$0xff]
    %v173 = vld [vmem:[#allocation2 + $0x110] sm:$0xff]
    %v174 = vld [vmem:[#allocation2 + $0x118] sm:$0xff]
    %v175 = vld [vmem:[#allocation2 + $0x120] sm:$0xff]
    %v176 = vld [vmem:[#allocation2 + $0x128] sm:$0xff]
    %v177 = vld [vmem:[#allocation2 + $0x130] sm:$0xff]
    %v178 = vld [vmem:[#allocation2 + $0x138] sm:$0xff]
    %v179 = vld [vmem:[#allocation2 + $0x140] sm:$0xff]
    %v180 = vld [vmem:[#allocation2 + $0x148] sm:$0xff]
    %v181 = vld [vmem:[#allocation2 + $0x150] sm:$0xff]
    %v182 = vld [vmem:[#allocation2 + $0x158] sm:$0xff]
    %v183 = vld [vmem:[#allocation2 + $0x160] sm:$0xff]
    %v184 = vld [vmem:[#allocation2 + $0x168] sm:$0xff]
    %v185 = vld [vmem:[#allocation2 + $0x170] sm:$0xff]
    %v186 = vld [vmem:[#allocation2 + $0x178] sm:$0xff]
    %v187 = vld [vmem:[#allocation2 + $0x180] sm:$0xff]
    %v188 = vld [vmem:[#allocation2 + $0x188] sm:$0xff]
    %v189 = vld [vmem:[#allocation2 + $0x190] sm:$0xff]
    %v190 = vld [vmem:[#allocation2 + $0x198] sm:$0xff]
    %v191 = vld [vmem:[#allocation2 + $0x1a0] sm:$0xff]
    %v192 = vld [vmem:[#allocation2 + $0x1a8] sm:$0xff]
    %v193 = vld [vmem:[#allocation2 + $0x1b0] sm:$0xff]
    %v194 = vld [vmem:[#allocation2 + $0x1b8] sm:$0xff]
    %v195 = vld [vmem:[#allocation2 + $0x1c0] sm:$0xff]
    %v196 = vld [vmem:[#allocation2 + $0x1c8] sm:$0xff]
    %v197 = vld [vmem:[#allocation2 + $0x1d0] sm:$0xff]
    %v198 = vld [vmem:[#allocation2 + $0x1d8] sm:$0xff]
    %v199 = vld [vmem:[#allocation2 + $0x1e0] sm:$0xff]
    %v200 = vld [vmem:[#allocation2 + $0x1e8] sm:$0xff]
    %v201 = vld [vmem:[#allocation2 + $0x1f0] sm:$0xff]
    %v202 = vld [vmem:[#allocation2 + $0x1f8] sm:$0xff]
    %v203 = vld [vmem:[#allocation2 + $0x200] sm:$0xff]
    %v204 = vld [vmem:[#allocation2 + $0x208] sm:$0xff]
    %v205 = vld [vmem:[#allocation2 + $0x210] sm:$0xff]
    %v206 = vld [vmem:[#allocation2 + $0x218] sm:$0xff]
    %v207 = vld [vmem:[#allocation2 + $0x220] sm:$0xff]
    %v208 = vld [vmem:[#allocation2 + $0x228] sm:$0xff]
    %v209 = vld [vmem:[#allocation2 + $0x230] sm:$0xff]
    %v210 = vld [vmem:[#allocation2 + $0x238] sm:$0xff]
    %v211 = vld [vmem:[#allocation2 + $0x240] sm:$0xff]
    %v212 = vld [vmem:[#allocation2 + $0x248] sm:$0xff]
    %v213 = vld [vmem:[#allocation2 + $0x250] sm:$0xff]
    %v214 = vld [vmem:[#allocation2 + $0x258] sm:$0xff]
    %v215 = vld [vmem:[#allocation2 + $0x260] sm:$0xff]
    %v216 = vld [vmem:[#allocation2 + $0x268] sm:$0xff]
    %v217 = vld [vmem:[#allocation2 + $0x270] sm:$0xff]
    %v218 = vld [vmem:[#allocation2 + $0x278] sm:$0xff]
    %v219 = vld [vmem:[#allocation2 + $0x280] sm:$0xff]
    %v220 = vld [vmem:[#allocation2 + $0x288] sm:$0xff]
    %v221 = vld [vmem:[#allocation2 + $0x290] sm:$0xff]
    %v222 = vld [vmem:[#allocation2 + $0x298] sm:$0xff]
    %v223 = vld [vmem:[#allocation2 + $0x2a0] sm:$0xff]
    %v224 = vld [vmem:[#allocation2 + $0x2a8] sm:$0xff]
    %v225 = vld [vmem:[#allocation2 + $0x2b0] sm:$0xff]
    %v226 = vld [vmem:[#allocation2 + $0x2b8] sm:$0xff]
    %v227 = vld [vmem:[#allocation2 + $0x2c0] sm:$0xff]
    %v228 = vld [vmem:[#allocation2 + $0x2c8] sm:$0xff]
    %v229 = vld [vmem:[#allocation2 + $0x2d0] sm:$0xff]
    %v230 = vld [vmem:[#allocation2 + $0x2d8] sm:$0xff]
    %v231 = vld [vmem:[#allocation2 + $0x2e0] sm:$0xff]
    %v232 = vld [vmem:[#allocation2 + $0x2e8] sm:$0xff]
    %v233 = vld [vmem:[#allocation2 + $0x2f0] sm:$0xff]
    %v234 = vld [vmem:[#allocation2 + $0x2f8] sm:$0xff]
    %v235 = vld [vmem:[#allocation2 + $0x300] sm:$0xff]
    %v236 = vld [vmem:[#allocation2 + $0x308] sm:$0xff]
    %v237 = vld [vmem:[#allocation2 + $0x310] sm:$0xff]
    %v238 = vld [vmem:[#allocation2 + $0x318] sm:$0xff]
    %v239 = vld [vmem:[#allocation2 + $0x320] sm:$0xff]
    %v240 = vld [vmem:[#allocation2 + $0x328] sm:$0xff]
    %v241 = vld [vmem:[#allocation2 + $0x330] sm:$0xff]
    %v242 = vld [vmem:[#allocation2 + $0x338] sm:$0xff]
    %v243 = vld [vmem:[#allocation2 + $0x340] sm:$0xff]
    %v244 = vld [vmem:[#allocation2 + $0x348] sm:$0xff]
    %v245 = vld [vmem:[#allocation2 + $0x350] sm:$0xff]
    %v246 = vld [vmem:[#allocation2 + $0x358] sm:$0xff]
    %v247 = vld [vmem:[#allocation2 + $0x360] sm:$0xff]
    %v248 = vld [vmem:[#allocation2 + $0x368] sm:$0xff]
    %v249 = vld [vmem:[#allocation2 + $0x370] sm:$0xff]
    %v250 = vld [vmem:[#allocation2 + $0x378] sm:$0xff]
    %v251 = vld [vmem:[#allocation2 + $0x380] sm:$0xff]
    %v252 = vld [vmem:[#allocation2 + $0x388] sm:$0xff]
    %v253 = vld [vmem:[#allocation2 + $0x390] sm:$0xff]
    %v254 = vld [vmem:[#allocation2 + $0x398] sm:$0xff]
    %v255 = vld [vmem:[#allocation2 + $0x3a0] sm:$0xff]
    %v256 = vld [vmem:[#allocation2 + $0x3a8] sm:$0xff]
    %v257 = vld [vmem:[#allocation2 + $0x3b0] sm:$0xff]
    %v258 = vld [vmem:[#allocation2 + $0x3b8] sm:$0xff]
    %v259 = vld [vmem:[#allocation2 + $0x3c0] sm:$0xff]
    %v260 = vld [vmem:[#allocation2 + $0x3c8] sm:$0xff]
    %v261 = vld [vmem:[#allocation2 + $0x3d0] sm:$0xff]
    %v262 = vld [vmem:[#allocation2 + $0x3d8] sm:$0xff]
    %v263 = vld [vmem:[#allocation2 + $0x3e0] sm:$0xff]
    %v264 = vld [vmem:[#allocation2 + $0x3e8] sm:$0xff]
    %v265 = vld [vmem:[#allocation2 + $0x3f0] sm:$0xff]
    %v266 = vld [vmem:[#allocation2 + $0x3f8] sm:$0xff]
    %v267 = vld [vmem:[#allocation2 + $0x400] sm:$0xff]
    %v268 = vld [vmem:[#allocation2 + $0x408] sm:$0xff]
    %v269 = vld [vmem:[#allocation2 + $0x410] sm:$0xff]
    %v270 = vld [vmem:[#allocation2 + $0x418] sm:$0xff]
    %v271 = vld [vmem:[#allocation2 + $0x420] sm:$0xff]
    %v272 = vld [vmem:[#allocation2 + $0x428] sm:$0xff]
    %v273 = vld [vmem:[#allocation2 + $0x430] sm:$0xff]
    %v274 = vld [vmem:[#allocation2 + $0x438] sm:$0xff]
    %v275 = vld [vmem:[#allocation2 + $0x440] sm:$0xff]
    %v276 = vld [vmem:[#allocation2 + $0x448] sm:$0xff]
    %v277 = vld [vmem:[#allocation2 + $0x450] sm:$0xff]
    %v278 = vld [vmem:[#allocation2 + $0x458] sm:$0xff]
    %v279 = vld [vmem:[#allocation2 + $0x460] sm:$0xff]
    %v280 = vld [vmem:[#allocation2 + $0x468] sm:$0xff]
    %v281 = vld [vmem:[#allocation2 + $0x470] sm:$0xff]
    %v282 = vld [vmem:[#allocation2 + $0x478] sm:$0xff]
    %v283 = vld [vmem:[#allocation2 + $0x480] sm:$0xff]
    %v284 = vld [vmem:[#allocation2 + $0x488] sm:$0xff]
    %v285 = vld [vmem:[#allocation2 + $0x490] sm:$0xff]
    %v286 = vld [vmem:[#allocation2 + $0x498] sm:$0xff]
    %v287 = vld [vmem:[#allocation2 + $0x4a0] sm:$0xff]
    %v288 = vld [vmem:[#allocation2 + $0x4a8] sm:$0xff]
    %v289 = vld [vmem:[#allocation2 + $0x4b0] sm:$0xff]
    %v290 = vld [vmem:[#allocation2 + $0x4b8] sm:$0xff]
    %v291 = vld [vmem:[#allocation2 + $0x4c0] sm:$0xff]
    %v292 = vld [vmem:[#allocation2 + $0x4c8] sm:$0xff]
    %v293 = vld [vmem:[#allocation2 + $0x4d0] sm:$0xff]
    %v294 = vld [vmem:[#allocation2 + $0x4d8] sm:$0xff]
    %v295 = vld [vmem:[#allocation2 + $0x4e0] sm:$0xff]
    %v296 = vld [vmem:[#allocation2 + $0x4e8] sm:$0xff]
    %v297 = vld [vmem:[#allocation2 + $0x4f0] sm:$0xff]
    %v298 = vld [vmem:[#allocation2 + $0x4f8] sm:$0xff]
    %v299 = vld [vmem:[#allocation2 + $0x500] sm:$0xff]
    %v300 = vld [vmem:[#allocation2 + $0x508] sm:$0xff]
    %v301 = vld [vmem:[#allocation2 + $0x510] sm:$0xff]
    %v302 = vld [vmem:[#allocation2 + $0x518] sm:$0xff]
    %v303 = vld [vmem:[#allocation2 + $0x520] sm:$0xff]
    %v304 = vld [vmem:[#allocation2 + $0x528] sm:$0xff]
    %v305 = vld [vmem:[#allocation2 + $0x530] sm:$0xff]
    %v306 = vld [vmem:[#allocation2 + $0x538] sm:$0xff]
    %v307 = vld [vmem:[#allocation2 + $0x540] sm:$0xff]
    %v308 = vld [vmem:[#allocation2 + $0x548] sm:$0xff]
    %v309 = vld [vmem:[#allocation2 + $0x550] sm:$0xff]
    %v310 = vld [vmem:[#allocation2 + $0x558] sm:$0xff]
    %v311 = vld [vmem:[#allocation2 + $0x560] sm:$0xff]
    %v312 = vld [vmem:[#allocation2 + $0x568] sm:$0xff]
    %v313 = vld [vmem:[#allocation2 + $0x570] sm:$0xff]
    %v314 = vld [vmem:[#allocation2 + $0x578] sm:$0xff]
    %v315 = vld [vmem:[#allocation2 + $0x580] sm:$0xff]
    %v316 = vld [vmem:[#allocation2 + $0x588] sm:$0xff]
    %v317 = vld [vmem:[#allocation2 + $0x590] sm:$0xff]
    %v318 = vld [vmem:[#allocation2 + $0x598] sm:$0xff]
    %v319 = vld [vmem:[#allocation2 + $0x5a0] sm:$0xff]
    %v320 = vld [vmem:[#allocation2 + $0x5a8] sm:$0xff]
    %v321 = vld [vmem:[#allocation2 + $0x5b0] sm:$0xff]
    %v322 = vld [vmem:[#allocation2 + $0x5b8] sm:$0xff]
    %v323 = vld [vmem:[#allocation2 + $0x5c0] sm:$0xff]
    %v324 = vld [vmem:[#allocation2 + $0x5c8] sm:$0xff]
    %v325 = vld [vmem:[#allocation2 + $0x5d0] sm:$0xff]
    %v326 = vld [vmem:[#allocation2 + $0x5d8] sm:$0xff]
    %v327 = vld [vmem:[#allocation2 + $0x5e0] sm:$0xff]
    %v328 = vld [vmem:[#allocation2 + $0x5e8] sm:$0xff]
    %v329 = vld [vmem:[#allocation2 + $0x5f0] sm:$0xff]
    %v330 = vld [vmem:[#allocation2 + $0x5f8] sm:$0xff]
    %v331 = vld [vmem:[#allocation2 + $0x600] sm:$0xff]
    %v332 = vld [vmem:[#allocation2 + $0x608] sm:$0xff]
    %v333 = vld [vmem:[#allocation2 + $0x610] sm:$0xff]
    %v334 = vld [vmem:[#allocation2 + $0x618] sm:$0xff]
    %v335 = vld [vmem:[#allocation2 + $0x620] sm:$0xff]
    %v336 = vld [vmem:[#allocation2 + $0x628] sm:$0xff]
    %v337 = vld [vmem:[#allocation2 + $0x630] sm:$0xff]
    %v338 = vld [vmem:[#allocation2 + $0x638] sm:$0xff]
    %v339 = vld [vmem:[#allocation2 + $0x640] sm:$0xff]
    %v340 = vld [vmem:[#allocation2 + $0x648] sm:$0xff]
    %v341 = vld [vmem:[#allocation2 + $0x650] sm:$0xff]
    %v342 = vld [vmem:[#allocation2 + $0x658] sm:$0xff]
    %v343 = vld [vmem:[#allocation2 + $0x660] sm:$0xff]
    %v344 = vld [vmem:[#allocation2 + $0x668] sm:$0xff]
    %v345 = vld [vmem:[#allocation2 + $0x670] sm:$0xff]
    %v346 = vld [vmem:[#allocation2 + $0x678] sm:$0xff]
    %v347 = vld [vmem:[#allocation2 + $0x680] sm:$0xff]
    %v348 = vld [vmem:[#allocation2 + $0x688] sm:$0xff]
    %v349 = vld [vmem:[#allocation2 + $0x690] sm:$0xff]
    %v350 = vld [vmem:[#allocation2 + $0x698] sm:$0xff]
    %v351 = vld [vmem:[#allocation2 + $0x6a0] sm:$0xff]
    %v352 = vld [vmem:[#allocation2 + $0x6a8] sm:$0xff]
    %v353 = vld [vmem:[#allocation2 + $0x6b0] sm:$0xff]
    %v354 = vld [vmem:[#allocation2 + $0x6b8] sm:$0xff]
    %v355 = vld [vmem:[#allocation2 + $0x6c0] sm:$0xff]
    %v356 = vld [vmem:[#allocation2 + $0x6c8] sm:$0xff]
    %v357 = vld [vmem:[#allocation2 + $0x6d0] sm:$0xff]
    %v358 = vld [vmem:[#allocation2 + $0x6d8] sm:$0xff]
    %v359 = vld [vmem:[#allocation2 + $0x6e0] sm:$0xff]
    %v360 = vld [vmem:[#allocation2 + $0x6e8] sm:$0xff]
    %v361 = vld [vmem:[#allocation2 + $0x6f0] sm:$0xff]
    %v362 = vld [vmem:[#allocation2 + $0x6f8] sm:$0xff]
    %v363 = vld [vmem:[#allocation2 + $0x700] sm:$0xff]
    %v364 = vld [vmem:[#allocation2 + $0x708] sm:$0xff]
    %v365 = vld [vmem:[#allocation2 + $0x710] sm:$0xff]
    %v366 = vld [vmem:[#allocation2 + $0x718] sm:$0xff]
    %v367 = vld [vmem:[#allocation2 + $0x720] sm:$0xff]
    %v368 = vld [vmem:[#allocation2 + $0x728] sm:$0xff]
    %v369 = vld [vmem:[#allocation2 + $0x730] sm:$0xff]
    %v370 = vld [vmem:[#allocation2 + $0x738] sm:$0xff]
    %v371 = vld [vmem:[#allocation2 + $0x740] sm:$0xff]
    %v372 = vld [vmem:[#allocation2 + $0x748] sm:$0xff]
    %v373 = vld [vmem:[#allocation2 + $0x750] sm:$0xff]
    %v374 = vld [vmem:[#allocation2 + $0x758] sm:$0xff]
    %v375 = vld [vmem:[#allocation2 + $0x760] sm:$0xff]
    %v376 = vld [vmem:[#allocation2 + $0x768] sm:$0xff]
    %v377 = vld [vmem:[#allocation2 + $0x770] sm:$0xff]
    %v378 = vld [vmem:[#allocation2 + $0x778] sm:$0xff]
    %v379 = vld [vmem:[#allocation2 + $0x780] sm:$0xff]
    %v380 = vld [vmem:[#allocation2 + $0x788] sm:$0xff]
    %v381 = vld [vmem:[#allocation2 + $0x790] sm:$0xff]
    %v382 = vld [vmem:[#allocation2 + $0x798] sm:$0xff]
    %v383 = vld [vmem:[#allocation2 + $0x7a0] sm:$0xff]
    %v384 = vld [vmem:[#allocation2 + $0x7a8] sm:$0xff]
    %v385 = vld [vmem:[#allocation2 + $0x7b0] sm:$0xff]
    %v386 = vld [vmem:[#allocation2 + $0x7b8] sm:$0xff]
    %v387 = vld [vmem:[#allocation2 + $0x7c0] sm:$0xff]
    %v388 = vld [vmem:[#allocation2 + $0x7c8] sm:$0xff]
    %v389 = vld [vmem:[#allocation2 + $0x7d0] sm:$0xff]
    %v390 = vld [vmem:[#allocation2 + $0x7d8] sm:$0xff]
    %v391 = vld [vmem:[#allocation2 + $0x7e0] sm:$0xff]
    %v392 = vld [vmem:[#allocation2 + $0x7e8] sm:$0xff]
    %v393 = vld [vmem:[#allocation2 + $0x7f0] sm:$0xff]
    %v394 = vld [vmem:[#allocation2 + $0x7f8] sm:$0xff]
    %v395 = vld [vmem:[#allocation2 + $0x800] sm:$0xff]
    %v396 = vld [vmem:[#allocation2 + $0x808] sm:$0xff]
    %v397 = vld [vmem:[#allocation2 + $0x810] sm:$0xff]
    %v398 = vld [vmem:[#allocation2 + $0x818] sm:$0xff]
    %v399 = vld [vmem:[#allocation2 + $0x820] sm:$0xff]
    %v400 = vld [vmem:[#allocation2 + $0x828] sm:$0xff]
    %v401 = vld [vmem:[#allocation2 + $0x830] sm:$0xff]
    %v402 = vld [vmem:[#allocation2 + $0x838] sm:$0xff]
    %v403 = vld [vmem:[#allocation2 + $0x840] sm:$0xff]
    %v404 = vld [vmem:[#allocation2 + $0x848] sm:$0xff]
    %v405 = vld [vmem:[#allocation2 + $0x850] sm:$0xff]
    %v406 = vld [vmem:[#allocation2 + $0x858] sm:$0xff]
    %v407 = vld [vmem:[#allocation2 + $0x860] sm:$0xff]
    %v408 = vld [vmem:[#allocation2 + $0x868] sm:$0xff]
    %v409 = vld [vmem:[#allocation2 + $0x870] sm:$0xff]
    %v410 = vld [vmem:[#allocation2 + $0x878] sm:$0xff]
    %v411 = vld [vmem:[#allocation2 + $0x880] sm:$0xff]
    %v412 = vld [vmem:[#allocation2 + $0x888] sm:$0xff]
    %v413 = vld [vmem:[#allocation2 + $0x890] sm:$0xff]
    %v414 = vld [vmem:[#allocation2 + $0x898] sm:$0xff]
    %v415 = vld [vmem:[#allocation2 + $0x8a0] sm:$0xff]
    %v416 = vld [vmem:[#allocation2 + $0x8a8] sm:$0xff]
    %v417 = vld [vmem:[#allocation2 + $0x8b0] sm:$0xff]
    %v418 = vld [vmem:[#allocation2 + $0x8b8] sm:$0xff]
    %v419 = vld [vmem:[#allocation2 + $0x8c0] sm:$0xff]
    %v420 = vld [vmem:[#allocation2 + $0x8c8] sm:$0xff]
    %v421 = vld [vmem:[#allocation2 + $0x8d0] sm:$0xff]
    %v422 = vld [vmem:[#allocation2 + $0x8d8] sm:$0xff]
    %v423 = vld [vmem:[#allocation2 + $0x8e0] sm:$0xff]
    %v424 = vld [vmem:[#allocation2 + $0x8e8] sm:$0xff]
    %v425 = vld [vmem:[#allocation2 + $0x8f0] sm:$0xff]
    %v426 = vld [vmem:[#allocation2 + $0x8f8] sm:$0xff]
    %v427 = vld [vmem:[#allocation2 + $0x900] sm:$0xff]
    %v428 = vld [vmem:[#allocation2 + $0x908] sm:$0xff]
    %v429 = vld [vmem:[#allocation2 + $0x910] sm:$0xff]
    %v430 = vld [vmem:[#allocation2 + $0x918] sm:$0xff]
    %v431 = vld [vmem:[#allocation2 + $0x920] sm:$0xff]
    %v432 = vld [vmem:[#allocation2 + $0x928] sm:$0xff]
    %v433 = vld [vmem:[#allocation2 + $0x930] sm:$0xff]
    %v434 = vld [vmem:[#allocation2 + $0x938] sm:$0xff]
    %v435 = vld [vmem:[#allocation2 + $0x940] sm:$0xff]
    %v436 = vld [vmem:[#allocation2 + $0x948] sm:$0xff]
    %v437 = vld [vmem:[#allocation2 + $0x950] sm:$0xff]
    %v438 = vld [vmem:[#allocation2 + $0x958] sm:$0xff]
    %v439 = vld [vmem:[#allocation2 + $0x960] sm:$0xff]
    %v440 = vld [vmem:[#allocation2 + $0x968] sm:$0xff]
    %v441 = vld [vmem:[#allocation2 + $0x970] sm:$0xff]
    %v442 = vld [vmem:[#allocation2 + $0x978] sm:$0xff]
    %v443 = vld [vmem:[#allocation2 + $0x980] sm:$0xff]
    %v444 = vld [vmem:[#allocation2 + $0x988] sm:$0xff]
    %v445 = vld [vmem:[#allocation2 + $0x990] sm:$0xff]
    %v446 = vld [vmem:[#allocation2 + $0x998] sm:$0xff]
    %v447 = vld [vmem:[#allocation2 + $0x9a0] sm:$0xff]
    %v448 = vld [vmem:[#allocation2 + $0x9a8] sm:$0xff]
    %v449 = vld [vmem:[#allocation2 + $0x9b0] sm:$0xff]
    %v450 = vld [vmem:[#allocation2 + $0x9b8] sm:$0xff]
    %v451 = vld [vmem:[#allocation2 + $0x9c0] sm:$0xff]
    %v452 = vld [vmem:[#allocation2 + $0x9c8] sm:$0xff]
    %v453 = vld [vmem:[#allocation2 + $0x9d0] sm:$0xff]
    %v454 = vld [vmem:[#allocation2 + $0x9d8] sm:$0xff]
    %v455 = vld [vmem:[#allocation2 + $0x9e0] sm:$0xff]
    %v456 = vld [vmem:[#allocation2 + $0x9e8] sm:$0xff]
    %v457 = vld [vmem:[#allocation2 + $0x9f0] sm:$0xff]
    %v458 = vld [vmem:[#allocation2 + $0x9f8] sm:$0xff]
    %v459 = vld [vmem:[#allocation2 + $0xa00] sm:$0xff]
    %v460 = vld [vmem:[#allocation2 + $0xa08] sm:$0xff]
    %v461 = vld [vmem:[#allocation2 + $0xa10] sm:$0xff]
    %v462 = vld [vmem:[#allocation2 + $0xa18] sm:$0xff]
    %v463 = vld [vmem:[#allocation2 + $0xa20] sm:$0xff]
    %v464 = vld [vmem:[#allocation2 + $0xa28] sm:$0xff]
    %v465 = vld [vmem:[#allocation2 + $0xa30] sm:$0xff]
    %v466 = vld [vmem:[#allocation2 + $0xa38] sm:$0xff]
    %v467 = vld [vmem:[#allocation2 + $0xa40] sm:$0xff]
    %v468 = vld [vmem:[#allocation2 + $0xa48] sm:$0xff]
    %v469 = vld [vmem:[#allocation2 + $0xa50] sm:$0xff]
    %v470 = vld [vmem:[#allocation2 + $0xa58] sm:$0xff]
    %v471 = vld [vmem:[#allocation2 + $0xa60] sm:$0xff]
    %v472 = vld [vmem:[#allocation2 + $0xa68] sm:$0xff]
    %v473 = vld [vmem:[#allocation2 + $0xa70] sm:$0xff]
    %v474 = vld [vmem:[#allocation2 + $0xa78] sm:$0xff]
    %v475 = vld [vmem:[#allocation2 + $0xa80] sm:$0xff]
    %v476 = vld [vmem:[#allocation2 + $0xa88] sm:$0xff]
    %v477 = vld [vmem:[#allocation2 + $0xa90] sm:$0xff]
    %v478 = vld [vmem:[#allocation2 + $0xa98] sm:$0xff]
    %v479 = vld [vmem:[#allocation2 + $0xaa0] sm:$0xff]
    %v480 = vld [vmem:[#allocation2 + $0xaa8] sm:$0xff]
    %v481 = vld [vmem:[#allocation2 + $0xab0] sm:$0xff]
    %v482 = vld [vmem:[#allocation2 + $0xab8] sm:$0xff]
    %v483 = vld [vmem:[#allocation2 + $0xac0] sm:$0xff]
    %v484 = vld [vmem:[#allocation2 + $0xac8] sm:$0xff]
    %v485 = vld [vmem:[#allocation2 + $0xad0] sm:$0xff]
    %v486 = vld [vmem:[#allocation2 + $0xad8] sm:$0xff]
    %v487 = vld [vmem:[#allocation2 + $0xae0] sm:$0xff]
    %v488 = vld [vmem:[#allocation2 + $0xae8] sm:$0xff]
    %v489 = vld [vmem:[#allocation2 + $0xaf0] sm:$0xff]
    %v490 = vld [vmem:[#allocation2 + $0xaf8] sm:$0xff]
    %v491 = vld [vmem:[#allocation2 + $0xb00] sm:$0xff]
    %v492 = vld [vmem:[#allocation2 + $0xb08] sm:$0xff]
    %v493 = vld [vmem:[#allocation2 + $0xb10] sm:$0xff]
    %v494 = vld [vmem:[#allocation2 + $0xb18] sm:$0xff]
    %v495 = vld [vmem:[#allocation2 + $0xb20] sm:$0xff]
    %v496 = vld [vmem:[#allocation2 + $0xb28] sm:$0xff]
    %v497 = vld [vmem:[#allocation2 + $0xb30] sm:$0xff]
    %v498 = vld [vmem:[#allocation2 + $0xb38] sm:$0xff]
    %v499 = vld [vmem:[#allocation2 + $0xb40] sm:$0xff]
    %v500 = vld [vmem:[#allocation2 + $0xb48] sm:$0xff]
    %v501 = vld [vmem:[#allocation2 + $0xb50] sm:$0xff]
    %v502 = vld [vmem:[#allocation2 + $0xb58] sm:$0xff]
    %v503 = vld [vmem:[#allocation2 + $0xb60] sm:$0xff]
    %v504 = vld [vmem:[#allocation2 + $0xb68] sm:$0xff]
    %v505 = vld [vmem:[#allocation2 + $0xb70] sm:$0xff]
    %v506 = vld [vmem:[#allocation2 + $0xb78] sm:$0xff]
    %v507 = vld [vmem:[#allocation2 + $0xb80] sm:$0xff]
    %v508 = vld [vmem:[#allocation2 + $0xb88] sm:$0xff]
    %v509 = vld [vmem:[#allocation2 + $0xb90] sm:$0xff]
    %v510 = vld [vmem:[#allocation2 + $0xb98] sm:$0xff]
    %v511 = vld [vmem:[#allocation2 + $0xba0] sm:$0xff]
    %v512 = vld [vmem:[#allocation2 + $0xba8] sm:$0xff]
    %v513 = vld [vmem:[#allocation2 + $0xbb0] sm:$0xff]
    %v514 = vld [vmem:[#allocation2 + $0xbb8] sm:$0xff]
    %v515 = vld [vmem:[#allocation2 + $0xbc0] sm:$0xff]
    %v516 = vld [vmem:[#allocation2 + $0xbc8] sm:$0xff]
    %v517 = vld [vmem:[#allocation2 + $0xbd0] sm:$0xff]
    %v518 = vld [vmem:[#allocation2 + $0xbd8] sm:$0xff]
    %v519 = vld [vmem:[#allocation2 + $0xbe0] sm:$0xff]
    %v520 = vld [vmem:[#allocation2 + $0xbe8] sm:$0xff]
    %v521 = vld [vmem:[#allocation2 + $0xbf0] sm:$0xff]
    %v522 = vld [vmem:[#allocation2 + $0xbf8] sm:$0xff]
    %v523 = vld [vmem:[#allocation5] sm:$0x1]
    %v525 = vperm.slane %v523, 0
    %551 = vst [vmem:[#allocation1] ss:$4 sm:$0xff] %v115
    %s552 = scalar_lea.vmem [#allocation1], 1
    %553 = vst [vmem:[%s552] ss:$4 sm:$0xff] %v121
    %s554 = scalar_lea.vmem [#allocation1], 2
    %555 = vst [vmem:[%s554] ss:$4 sm:$0xff] %v127
    %s556 = scalar_lea.vmem [#allocation1], 3
    %557 = vst [vmem:[%s556] ss:$4 sm:$0xff] %v133
    %s558 = scalar_lea.vmem [#allocation1], 32
    %559 = vst [vmem:[%s558] ss:$4 sm:$0xff] %v116
    %s560 = scalar_lea.vmem [#allocation1], 33
    %561 = vst [vmem:[%s560] ss:$4 sm:$0xff] %v122
    %s562 = scalar_lea.vmem [#allocation1], 34
    %563 = vst [vmem:[%s562] ss:$4 sm:$0xff] %v128
    %s564 = scalar_lea.vmem [#allocation1], 35
    %565 = vst [vmem:[%s564] ss:$4 sm:$0xff] %v134
    %v566 = vld.sshfl [vmem:[#allocation1] sm:$0xff pattern:$0x73625140]
    %v567 = vld.sshfl [vmem:[#allocation1 + $0x8] sm:$0xff pattern:$0x73625140]
    %v568 = vld.sshfl [vmem:[#allocation1 + $0x10] sm:$0xff pattern:$0x73625140]
    %v569 = vld.sshfl [vmem:[#allocation1 + $0x18] sm:$0xff pattern:$0x73625140]
    %v570 = vld.sshfl [vmem:[#allocation1 + $0x20] sm:$0xff pattern:$0x73625140]
    %v571 = vld.sshfl [vmem:[#allocation1 + $0x28] sm:$0xff pattern:$0x73625140]
    %v572 = vld.sshfl [vmem:[#allocation1 + $0x30] sm:$0xff pattern:$0x73625140]
    %v573 = vld.sshfl [vmem:[#allocation1 + $0x38] sm:$0xff pattern:$0x73625140]
    %574 = vst [vmem:[#allocation1] ss:$4 sm:$0xff] %v117
    %575 = vst [vmem:[%s552] ss:$4 sm:$0xff] %v123
    %576 = vst [vmem:[%s554] ss:$4 sm:$0xff] %v129
    %577 = vst [vmem:[%s556] ss:$4 sm:$0xff] %v135
    %578 = vst [vmem:[%s558] ss:$4 sm:$0xff] %v118
    %579 = vst [vmem:[%s560] ss:$4 sm:$0xff] %v124
    %580 = vst [vmem:[%s562] ss:$4 sm:$0xff] %v130
    %581 = vst [vmem:[%s564] ss:$4 sm:$0xff] %v136
    %v582 = vld.sshfl [vmem:[#allocation1] sm:$0xff pattern:$0x73625140]
    %v583 = vld.sshfl [vmem:[#allocation1 + $0x8] sm:$0xff pattern:$0x73625140]
    %v584 = vld.sshfl [vmem:[#allocation1 + $0x10] sm:$0xff pattern:$0x73625140]
    %v585 = vld.sshfl [vmem:[#allocation1 + $0x18] sm:$0xff pattern:$0x73625140]
    %v586 = vld.sshfl [vmem:[#allocation1 + $0x20] sm:$0xff pattern:$0x73625140]
    %v587 = vld.sshfl [vmem:[#allocation1 + $0x28] sm:$0xff pattern:$0x73625140]
    %v588 = vld.sshfl [vmem:[#allocation1 + $0x30] sm:$0xff pattern:$0x73625140]
    %v589 = vld.sshfl [vmem:[#allocation1 + $0x38] sm:$0xff pattern:$0x73625140]
    %590 = vst [vmem:[#allocation1] ss:$4 sm:$0xff] %v119
    %591 = vst [vmem:[%s552] ss:$4 sm:$0xff] %v125
    %592 = vst [vmem:[%s554] ss:$4 sm:$0xff] %v131
    %593 = vst [vmem:[%s556] ss:$4 sm:$0xff] %v137
    %594 = vst [vmem:[%s558] ss:$4 sm:$0xff] %v120
    %595 = vst [vmem:[%s560] ss:$4 sm:$0xff] %v126
    %596 = vst [vmem:[%s562] ss:$4 sm:$0xff] %v132
    %597 = vst [vmem:[%s564] ss:$4 sm:$0xff] %v138
    %v598 = vld.sshfl [vmem:[#allocation1] sm:$0xff pattern:$0x73625140]
    %v599 = vld.sshfl [vmem:[#allocation1 + $0x8] sm:$0xff pattern:$0x73625140]
    %v600 = vld.sshfl [vmem:[#allocation1 + $0x10] sm:$0xff pattern:$0x73625140]
    %v601 = vld.sshfl [vmem:[#allocation1 + $0x18] sm:$0xff pattern:$0x73625140]
    %v602 = vld.sshfl [vmem:[#allocation1 + $0x20] sm:$0xff pattern:$0x73625140]
    %v603 = vld.sshfl [vmem:[#allocation1 + $0x28] sm:$0xff pattern:$0x73625140]
    %v604 = vld.sshfl [vmem:[#allocation1 + $0x30] sm:$0xff pattern:$0x73625140]
    %v605 = vld.sshfl [vmem:[#allocation1 + $0x38] sm:$0xff pattern:$0x73625140]
    %630 = vmatpush.msra.mxu0 %v154
    %631 = vmatpush.msra.mxu0 %v153
    %632 = vmatpush.msra.mxu0 %v152
    %633 = vmatpush.msra.mxu0 %v151
    %634 = vmatpush.msra.mxu0 %v150
    %635 = vmatpush.msra.mxu0 %v149
    %636 = vmatpush.msra.mxu0 %v148
    %637 = vmatpush.msra.mxu0 %v147
    %638 = vmatpush.msra.mxu0 %v146
    %639 = vmatpush.msra.mxu0 %v145
    %640 = vmatpush.msra.mxu0 %v144
    %641 = vmatpush.msra.mxu0 %v143
    %642 = vmatpush.msra.mxu0 %v142
    %643 = vmatpush.msra.mxu0 %v141
    %644 = vmatpush.msra.mxu0 %v140
    %645 = vmatpush.msra.mxu0 %v139
    %646 = vmatmul.f32.gmra.mxu0 %v566
    %v647 = vpop.f32.mrf.mxu0
    %v648 = vadd.f32 %v525, %v647
    %649 = vdwg.mxu0
    %650 = vmatpush.msra.mxu0 %v170
    %651 = vmatpush.msra.mxu0 %v169
    %652 = vmatpush.msra.mxu0 %v168
    %653 = vmatpush.msra.mxu0 %v167
    %654 = vmatpush.msra.mxu0 %v166
    %655 = vmatpush.msra.mxu0 %v165
    %656 = vmatpush.msra.mxu0 %v164
    %657 = vmatpush.msra.mxu0 %v163
    %658 = vmatpush.msra.mxu0 %v162
    %659 = vmatpush.msra.mxu0 %v161
    %660 = vmatpush.msra.mxu0 %v160
    %661 = vmatpush.msra.mxu0 %v159
    %662 = vmatpush.msra.mxu0 %v158
    %663 = vmatpush.msra.mxu0 %v157
    %664 = vmatpush.msra.mxu0 %v156
    %665 = vmatpush.msra.mxu0 %v155
    %666 = vmatmul.f32.gmra.mxu0 %v567
    %v667 = vpop.f32.mrf.mxu0
    %v668 = vadd.f32 %v648, %v667
    %669 = vdwg.mxu0
    %670 = vmatpush.msra.mxu0 %v186
    %671 = vmatpush.msra.mxu0 %v185
    %672 = vmatpush.msra.mxu0 %v184
    %673 = vmatpush.msra.mxu0 %v183
    %674 = vmatpush.msra.mxu0 %v182
    %675 = vmatpush.msra.mxu0 %v181
    %676 = vmatpush.msra.mxu0 %v180
    %677 = vmatpush.msra.mxu0 %v179
    %678 = vmatpush.msra.mxu0 %v178
    %679 = vmatpush.msra.mxu0 %v177
    %680 = vmatpush.msra.mxu0 %v176
    %681 = vmatpush.msra.mxu0 %v175
    %682 = vmatpush.msra.mxu0 %v174
    %683 = vmatpush.msra.mxu0 %v173
    %684 = vmatpush.msra.mxu0 %v172
    %685 = vmatpush.msra.mxu0 %v171
    %686 = vmatmul.f32.gmra.mxu0 %v568
    %v687 = vpop.f32.mrf.mxu0
    %v688 = vadd.f32 %v668, %v687
    %689 = vdwg.mxu0
    %690 = vmatpush.msra.mxu0 %v202
    %691 = vmatpush.msra.mxu0 %v201
    %692 = vmatpush.msra.mxu0 %v200
    %693 = vmatpush.msra.mxu0 %v199
    %694 = vmatpush.msra.mxu0 %v198
    %695 = vmatpush.msra.mxu0 %v197
    %696 = vmatpush.msra.mxu0 %v196
    %697 = vmatpush.msra.mxu0 %v195
    %698 = vmatpush.msra.mxu0 %v194
    %699 = vmatpush.msra.mxu0 %v193
    %700 = vmatpush.msra.mxu0 %v192
    %701 = vmatpush.msra.mxu0 %v191
    %702 = vmatpush.msra.mxu0 %v190
    %703 = vmatpush.msra.mxu0 %v189
    %704 = vmatpush.msra.mxu0 %v188
    %705 = vmatpush.msra.mxu0 %v187
    %706 = vmatmul.f32.gmra.mxu0 %v569
    %v707 = vpop.f32.mrf.mxu0
    %v708 = vadd.f32 %v688, %v707
    %709 = vdwg.mxu0
    %710 = vmatpush.msra.mxu0 %v218
    %711 = vmatpush.msra.mxu0 %v217
    %712 = vmatpush.msra.mxu0 %v216
    %713 = vmatpush.msra.mxu0 %v215
    %714 = vmatpush.msra.mxu0 %v214
    %715 = vmatpush.msra.mxu0 %v213
    %716 = vmatpush.msra.mxu0 %v212
    %717 = vmatpush.msra.mxu0 %v211
    %718 = vmatpush.msra.mxu0 %v210
    %719 = vmatpush.msra.mxu0 %v209
    %720 = vmatpush.msra.mxu0 %v208
    %721 = vmatpush.msra.mxu0 %v207
    %722 = vmatpush.msra.mxu0 %v206
    %723 = vmatpush.msra.mxu0 %v205
    %724 = vmatpush.msra.mxu0 %v204
    %725 = vmatpush.msra.mxu0 %v203
    %726 = vmatmul.f32.gmra.mxu0 %v570
    %v727 = vpop.f32.mrf.mxu0
    %v728 = vadd.f32 %v708, %v727
    %729 = vdwg.mxu0
    %730 = vmatpush.msra.mxu0 %v234
    %731 = vmatpush.msra.mxu0 %v233
    %732 = vmatpush.msra.mxu0 %v232
    %733 = vmatpush.msra.mxu0 %v231
    %734 = vmatpush.msra.mxu0 %v230
    %735 = vmatpush.msra.mxu0 %v229
    %736 = vmatpush.msra.mxu0 %v228
    %737 = vmatpush.msra.mxu0 %v227
    %738 = vmatpush.msra.mxu0 %v226
    %739 = vmatpush.msra.mxu0 %v225
    %740 = vmatpush.msra.mxu0 %v224
    %741 = vmatpush.msra.mxu0 %v223
    %742 = vmatpush.msra.mxu0 %v222
    %743 = vmatpush.msra.mxu0 %v221
    %744 = vmatpush.msra.mxu0 %v220
    %745 = vmatpush.msra.mxu0 %v219
    %746 = vmatmul.f32.gmra.mxu0 %v571
    %v747 = vpop.f32.mrf.mxu0
    %v748 = vadd.f32 %v728, %v747
    %749 = vdwg.mxu0
    %750 = vmatpush.msra.mxu0 %v250
    %751 = vmatpush.msra.mxu0 %v249
    %752 = vmatpush.msra.mxu0 %v248
    %753 = vmatpush.msra.mxu0 %v247
    %754 = vmatpush.msra.mxu0 %v246
    %755 = vmatpush.msra.mxu0 %v245
    %756 = vmatpush.msra.mxu0 %v244
    %757 = vmatpush.msra.mxu0 %v243
    %758 = vmatpush.msra.mxu0 %v242
    %759 = vmatpush.msra.mxu0 %v241
    %760 = vmatpush.msra.mxu0 %v240
    %761 = vmatpush.msra.mxu0 %v239
    %762 = vmatpush.msra.mxu0 %v238
    %763 = vmatpush.msra.mxu0 %v237
    %764 = vmatpush.msra.mxu0 %v236
    %765 = vmatpush.msra.mxu0 %v235
    %766 = vmatmul.f32.gmra.mxu0 %v572
    %v767 = vpop.f32.mrf.mxu0
    %v768 = vadd.f32 %v748, %v767
    %769 = vdwg.mxu0
    %770 = vmatpush.msra.mxu0 %v266
    %771 = vmatpush.msra.mxu0 %v265
    %772 = vmatpush.msra.mxu0 %v264
    %773 = vmatpush.msra.mxu0 %v263
    %774 = vmatpush.msra.mxu0 %v262
    %775 = vmatpush.msra.mxu0 %v261
    %776 = vmatpush.msra.mxu0 %v260
    %777 = vmatpush.msra.mxu0 %v259
    %778 = vmatpush.msra.mxu0 %v258
    %779 = vmatpush.msra.mxu0 %v257
    %780 = vmatpush.msra.mxu0 %v256
    %781 = vmatpush.msra.mxu0 %v255
    %782 = vmatpush.msra.mxu0 %v254
    %783 = vmatpush.msra.mxu0 %v253
    %784 = vmatpush.msra.mxu0 %v252
    %785 = vmatpush.msra.mxu0 %v251
    %786 = vmatmul.f32.gmra.mxu0 %v573
    %v787 = vpop.f32.mrf.mxu0
    %v788 = vadd.f32 %v768, %v787
    %789 = vdwg.mxu0
    %790 = vmatpush.msra.mxu0 %v282
    %791 = vmatpush.msra.mxu0 %v281
    %792 = vmatpush.msra.mxu0 %v280
    %793 = vmatpush.msra.mxu0 %v279
    %794 = vmatpush.msra.mxu0 %v278
    %795 = vmatpush.msra.mxu0 %v277
    %796 = vmatpush.msra.mxu0 %v276
    %797 = vmatpush.msra.mxu0 %v275
    %798 = vmatpush.msra.mxu0 %v274
    %799 = vmatpush.msra.mxu0 %v273
    %800 = vmatpush.msra.mxu0 %v272
    %801 = vmatpush.msra.mxu0 %v271
    %802 = vmatpush.msra.mxu0 %v270
    %803 = vmatpush.msra.mxu0 %v269
    %804 = vmatpush.msra.mxu0 %v268
    %805 = vmatpush.msra.mxu0 %v267
    %806 = vmatmul.f32.gmra.mxu0 %v582
    %v807 = vpop.f32.mrf.mxu0
    %v808 = vadd.f32 %v788, %v807
    %809 = vdwg.mxu0
    %810 = vmatpush.msra.mxu0 %v298
    %811 = vmatpush.msra.mxu0 %v297
    %812 = vmatpush.msra.mxu0 %v296
    %813 = vmatpush.msra.mxu0 %v295
    %814 = vmatpush.msra.mxu0 %v294
    %815 = vmatpush.msra.mxu0 %v293
    %816 = vmatpush.msra.mxu0 %v292
    %817 = vmatpush.msra.mxu0 %v291
    %818 = vmatpush.msra.mxu0 %v290
    %819 = vmatpush.msra.mxu0 %v289
    %820 = vmatpush.msra.mxu0 %v288
    %821 = vmatpush.msra.mxu0 %v287
    %822 = vmatpush.msra.mxu0 %v286
    %823 = vmatpush.msra.mxu0 %v285
    %824 = vmatpush.msra.mxu0 %v284
    %825 = vmatpush.msra.mxu0 %v283
    %826 = vmatmul.f32.gmra.mxu0 %v583
    %v827 = vpop.f32.mrf.mxu0
    %v828 = vadd.f32 %v808, %v827
    %829 = vdwg.mxu0
    %830 = vmatpush.msra.mxu0 %v314
    %831 = vmatpush.msra.mxu0 %v313
    %832 = vmatpush.msra.mxu0 %v312
    %833 = vmatpush.msra.mxu0 %v311
    %834 = vmatpush.msra.mxu0 %v310
    %835 = vmatpush.msra.mxu0 %v309
    %836 = vmatpush.msra.mxu0 %v308
    %837 = vmatpush.msra.mxu0 %v307
    %838 = vmatpush.msra.mxu0 %v306
    %839 = vmatpush.msra.mxu0 %v305
    %840 = vmatpush.msra.mxu0 %v304
    %841 = vmatpush.msra.mxu0 %v303
    %842 = vmatpush.msra.mxu0 %v302
    %843 = vmatpush.msra.mxu0 %v301
    %844 = vmatpush.msra.mxu0 %v300
    %845 = vmatpush.msra.mxu0 %v299
    %846 = vmatmul.f32.gmra.mxu0 %v584
    %v847 = vpop.f32.mrf.mxu0
    %v848 = vadd.f32 %v828, %v847
    %849 = vdwg.mxu0
    %850 = vmatpush.msra.mxu0 %v330
    %851 = vmatpush.msra.mxu0 %v329
    %852 = vmatpush.msra.mxu0 %v328
    %853 = vmatpush.msra.mxu0 %v327
    %854 = vmatpush.msra.mxu0 %v326
    %855 = vmatpush.msra.mxu0 %v325
    %856 = vmatpush.msra.mxu0 %v324
    %857 = vmatpush.msra.mxu0 %v323
    %858 = vmatpush.msra.mxu0 %v322
    %859 = vmatpush.msra.mxu0 %v321
    %860 = vmatpush.msra.mxu0 %v320
    %861 = vmatpush.msra.mxu0 %v319
    %862 = vmatpush.msra.mxu0 %v318
    %863 = vmatpush.msra.mxu0 %v317
    %864 = vmatpush.msra.mxu0 %v316
    %865 = vmatpush.msra.mxu0 %v315
    %866 = vmatmul.f32.gmra.mxu0 %v585
    %v867 = vpop.f32.mrf.mxu0
    %v868 = vadd.f32 %v848, %v867
    %869 = vdwg.mxu0
    %870 = vmatpush.msra.mxu0 %v346
    %871 = vmatpush.msra.mxu0 %v345
    %872 = vmatpush.msra.mxu0 %v344
    %873 = vmatpush.msra.mxu0 %v343
    %874 = vmatpush.msra.mxu0 %v342
    %875 = vmatpush.msra.mxu0 %v341
    %876 = vmatpush.msra.mxu0 %v340
    %877 = vmatpush.msra.mxu0 %v339
    %878 = vmatpush.msra.mxu0 %v338
    %879 = vmatpush.msra.mxu0 %v337
    %880 = vmatpush.msra.mxu0 %v336
    %881 = vmatpush.msra.mxu0 %v335
    %882 = vmatpush.msra.mxu0 %v334
    %883 = vmatpush.msra.mxu0 %v333
    %884 = vmatpush.msra.mxu0 %v332
    %885 = vmatpush.msra.mxu0 %v331
    %886 = vmatmul.f32.gmra.mxu0 %v586
    %v887 = vpop.f32.mrf.mxu0
    %v888 = vadd.f32 %v868, %v887
    %889 = vdwg.mxu0
    %890 = vmatpush.msra.mxu0 %v362
    %891 = vmatpush.msra.mxu0 %v361
    %892 = vmatpush.msra.mxu0 %v360
    %893 = vmatpush.msra.mxu0 %v359
    %894 = vmatpush.msra.mxu0 %v358
    %895 = vmatpush.msra.mxu0 %v357
    %896 = vmatpush.msra.mxu0 %v356
    %897 = vmatpush.msra.mxu0 %v355
    %898 = vmatpush.msra.mxu0 %v354
    %899 = vmatpush.msra.mxu0 %v353
    %900 = vmatpush.msra.mxu0 %v352
    %901 = vmatpush.msra.mxu0 %v351
    %902 = vmatpush.msra.mxu0 %v350
    %903 = vmatpush.msra.mxu0 %v349
    %904 = vmatpush.msra.mxu0 %v348
    %905 = vmatpush.msra.mxu0 %v347
    %906 = vmatmul.f32.gmra.mxu0 %v587
    %v907 = vpop.f32.mrf.mxu0
    %v908 = vadd.f32 %v888, %v907
    %909 = vdwg.mxu0
    %910 = vmatpush.msra.mxu0 %v378
    %911 = vmatpush.msra.mxu0 %v377
    %912 = vmatpush.msra.mxu0 %v376
    %913 = vmatpush.msra.mxu0 %v375
    %914 = vmatpush.msra.mxu0 %v374
    %915 = vmatpush.msra.mxu0 %v373
    %916 = vmatpush.msra.mxu0 %v372
    %917 = vmatpush.msra.mxu0 %v371
    %918 = vmatpush.msra.mxu0 %v370
    %919 = vmatpush.msra.mxu0 %v369
    %920 = vmatpush.msra.mxu0 %v368
    %921 = vmatpush.msra.mxu0 %v367
    %922 = vmatpush.msra.mxu0 %v366
    %923 = vmatpush.msra.mxu0 %v365
    %924 = vmatpush.msra.mxu0 %v364
    %925 = vmatpush.msra.mxu0 %v363
    %926 = vmatmul.f32.gmra.mxu0 %v588
    %v927 = vpop.f32.mrf.mxu0
    %v928 = vadd.f32 %v908, %v927
    %929 = vdwg.mxu0
    %930 = vmatpush.msra.mxu0 %v394
    %931 = vmatpush.msra.mxu0 %v393
    %932 = vmatpush.msra.mxu0 %v392
    %933 = vmatpush.msra.mxu0 %v391
    %934 = vmatpush.msra.mxu0 %v390
    %935 = vmatpush.msra.mxu0 %v389
    %936 = vmatpush.msra.mxu0 %v388
    %937 = vmatpush.msra.mxu0 %v387
    %938 = vmatpush.msra.mxu0 %v386
    %939 = vmatpush.msra.mxu0 %v385
    %940 = vmatpush.msra.mxu0 %v384
    %941 = vmatpush.msra.mxu0 %v383
    %942 = vmatpush.msra.mxu0 %v382
    %943 = vmatpush.msra.mxu0 %v381
    %944 = vmatpush.msra.mxu0 %v380
    %945 = vmatpush.msra.mxu0 %v379
    %946 = vmatmul.f32.gmra.mxu0 %v589
    %v947 = vpop.f32.mrf.mxu0
    %v948 = vadd.f32 %v928, %v947
    %949 = vdwg.mxu0
    %950 = vmatpush.msra.mxu0 %v410
    %951 = vmatpush.msra.mxu0 %v409
    %952 = vmatpush.msra.mxu0 %v408
    %953 = vmatpush.msra.mxu0 %v407
    %954 = vmatpush.msra.mxu0 %v406
    %955 = vmatpush.msra.mxu0 %v405
    %956 = vmatpush.msra.mxu0 %v404
    %957 = vmatpush.msra.mxu0 %v403
    %958 = vmatpush.msra.mxu0 %v402
    %959 = vmatpush.msra.mxu0 %v401
    %960 = vmatpush.msra.mxu0 %v400
    %961 = vmatpush.msra.mxu0 %v399
    %962 = vmatpush.msra.mxu0 %v398
    %963 = vmatpush.msra.mxu0 %v397
    %964 = vmatpush.msra.mxu0 %v396
    %965 = vmatpush.msra.mxu0 %v395
    %966 = vmatmul.f32.gmra.mxu0 %v598
    %v967 = vpop.f32.mrf.mxu0
    %v968 = vadd.f32 %v948, %v967
    %969 = vdwg.mxu0
    %970 = vmatpush.msra.mxu0 %v426
    %971 = vmatpush.msra.mxu0 %v425
    %972 = vmatpush.msra.mxu0 %v424
    %973 = vmatpush.msra.mxu0 %v423
    %974 = vmatpush.msra.mxu0 %v422
    %975 = vmatpush.msra.mxu0 %v421
    %976 = vmatpush.msra.mxu0 %v420
    %977 = vmatpush.msra.mxu0 %v419
    %978 = vmatpush.msra.mxu0 %v418
    %979 = vmatpush.msra.mxu0 %v417
    %980 = vmatpush.msra.mxu0 %v416
    %981 = vmatpush.msra.mxu0 %v415
    %982 = vmatpush.msra.mxu0 %v414
    %983 = vmatpush.msra.mxu0 %v413
    %984 = vmatpush.msra.mxu0 %v412
    %985 = vmatpush.msra.mxu0 %v411
    %986 = vmatmul.f32.gmra.mxu0 %v599
    %v987 = vpop.f32.mrf.mxu0
    %v988 = vadd.f32 %v968, %v987
    %989 = vdwg.mxu0
    %990 = vmatpush.msra.mxu0 %v442
    %991 = vmatpush.msra.mxu0 %v441
    %992 = vmatpush.msra.mxu0 %v440
    %993 = vmatpush.msra.mxu0 %v439
    %994 = vmatpush.msra.mxu0 %v438
    %995 = vmatpush.msra.mxu0 %v437
    %996 = vmatpush.msra.mxu0 %v436
    %997 = vmatpush.msra.mxu0 %v435
    %998 = vmatpush.msra.mxu0 %v434
    %999 = vmatpush.msra.mxu0 %v433
    %1000 = vmatpush.msra.mxu0 %v432
    %1001 = vmatpush.msra.mxu0 %v431
    %1002 = vmatpush.msra.mxu0 %v430
    %1003 = vmatpush.msra.mxu0 %v429
    %1004 = vmatpush.msra.mxu0 %v428
    %1005 = vmatpush.msra.mxu0 %v427
    %1006 = vmatmul.f32.gmra.mxu0 %v600
    %v1007 = vpop.f32.mrf.mxu0
    %v1008 = vadd.f32 %v988, %v1007
    %1009 = vdwg.mxu0
    %1010 = vmatpush.msra.mxu0 %v458
    %1011 = vmatpush.msra.mxu0 %v457
    %1012 = vmatpush.msra.mxu0 %v456
    %1013 = vmatpush.msra.mxu0 %v455
    %1014 = vmatpush.msra.mxu0 %v454
    %1015 = vmatpush.msra.mxu0 %v453
    %1016 = vmatpush.msra.mxu0 %v452
    %1017 = vmatpush.msra.mxu0 %v451
    %1018 = vmatpush.msra.mxu0 %v450
    %1019 = vmatpush.msra.mxu0 %v449
    %1020 = vmatpush.msra.mxu0 %v448
    %1021 = vmatpush.msra.mxu0 %v447
    %1022 = vmatpush.msra.mxu0 %v446
    %1023 = vmatpush.msra.mxu0 %v445
    %1024 = vmatpush.msra.mxu0 %v444
    %1025 = vmatpush.msra.mxu0 %v443
    %1026 = vmatmul.f32.gmra.mxu0 %v601
    %v1027 = vpop.f32.mrf.mxu0
    %v1028 = vadd.f32 %v1008, %v1027
    %1029 = vdwg.mxu0
    %1030 = vmatpush.msra.mxu0 %v474
    %1031 = vmatpush.msra.mxu0 %v473
    %1032 = vmatpush.msra.mxu0 %v472
    %1033 = vmatpush.msra.mxu0 %v471
    %1034 = vmatpush.msra.mxu0 %v470
    %1035 = vmatpush.msra.mxu0 %v469
    %1036 = vmatpush.msra.mxu0 %v468
    %1037 = vmatpush.msra.mxu0 %v467
    %1038 = vmatpush.msra.mxu0 %v466
    %1039 = vmatpush.msra.mxu0 %v465
    %1040 = vmatpush.msra.mxu0 %v464
    %1041 = vmatpush.msra.mxu0 %v463
    %1042 = vmatpush.msra.mxu0 %v462
    %1043 = vmatpush.msra.mxu0 %v461
    %1044 = vmatpush.msra.mxu0 %v460
    %1045 = vmatpush.msra.mxu0 %v459
    %1046 = vmatmul.f32.gmra.mxu0 %v602
    %v1047 = vpop.f32.mrf.mxu0
    %v1048 = vadd.f32 %v1028, %v1047
    %1049 = vdwg.mxu0
    %1050 = vmatpush.msra.mxu0 %v490
    %1051 = vmatpush.msra.mxu0 %v489
    %1052 = vmatpush.msra.mxu0 %v488
    %1053 = vmatpush.msra.mxu0 %v487
    %1054 = vmatpush.msra.mxu0 %v486
    %1055 = vmatpush.msra.mxu0 %v485
    %1056 = vmatpush.msra.mxu0 %v484
    %1057 = vmatpush.msra.mxu0 %v483
    %1058 = vmatpush.msra.mxu0 %v482
    %1059 = vmatpush.msra.mxu0 %v481
    %1060 = vmatpush.msra.mxu0 %v480
    %1061 = vmatpush.msra.mxu0 %v479
    %1062 = vmatpush.msra.mxu0 %v478
    %1063 = vmatpush.msra.mxu0 %v477
    %1064 = vmatpush.msra.mxu0 %v476
    %1065 = vmatpush.msra.mxu0 %v475
    %1066 = vmatmul.f32.gmra.mxu0 %v603
    %v1067 = vpop.f32.mrf.mxu0
    %v1068 = vadd.f32 %v1048, %v1067
    %1069 = vdwg.mxu0
    %1070 = vmatpush.msra.mxu0 %v506
    %1071 = vmatpush.msra.mxu0 %v505
    %1072 = vmatpush.msra.mxu0 %v504
    %1073 = vmatpush.msra.mxu0 %v503
    %1074 = vmatpush.msra.mxu0 %v502
    %1075 = vmatpush.msra.mxu0 %v501
    %1076 = vmatpush.msra.mxu0 %v500
    %1077 = vmatpush.msra.mxu0 %v499
    %1078 = vmatpush.msra.mxu0 %v498
    %1079 = vmatpush.msra.mxu0 %v497
    %1080 = vmatpush.msra.mxu0 %v496
    %1081 = vmatpush.msra.mxu0 %v495
    %1082 = vmatpush.msra.mxu0 %v494
    %1083 = vmatpush.msra.mxu0 %v493
    %1084 = vmatpush.msra.mxu0 %v492
    %1085 = vmatpush.msra.mxu0 %v491
    %1086 = vmatmul.f32.gmra.mxu0 %v604
    %v1087 = vpop.f32.mrf.mxu0
    %v1088 = vadd.f32 %v1068, %v1087
    %1089 = vdwg.mxu0
    %1090 = vmatpush.msra.mxu0 %v522
    %1091 = vmatpush.msra.mxu0 %v521
    %1092 = vmatpush.msra.mxu0 %v520
    %1093 = vmatpush.msra.mxu0 %v519
    %1094 = vmatpush.msra.mxu0 %v518
    %1095 = vmatpush.msra.mxu0 %v517
    %1096 = vmatpush.msra.mxu0 %v516
    %1097 = vmatpush.msra.mxu0 %v515
    %1098 = vmatpush.msra.mxu0 %v514
    %1099 = vmatpush.msra.mxu0 %v513
    %1100 = vmatpush.msra.mxu0 %v512
    %1101 = vmatpush.msra.mxu0 %v511
    %1102 = vmatpush.msra.mxu0 %v510
    %1103 = vmatpush.msra.mxu0 %v509
    %1104 = vmatpush.msra.mxu0 %v508
    %1105 = vmatpush.msra.mxu0 %v507
    %1106 = vmatmul.f32.gmra.mxu0 %v605
    %v1107 = vpop.f32.mrf.mxu0
    %v1108 = vadd.f32 %v1088, %v1107
    %1109 = vdwg.mxu0
    %v1110 = vmax.f32 %v1108, 0.0
    %v1111 = vld [vmem:[#allocation7] sm:$0xff]
    %v1112 = vld [vmem:[#allocation7 + $0x8] sm:$0xff]
    %v1113 = vld [vmem:[#allocation7 + $0x10] sm:$0xff]
    %v1114 = vld [vmem:[#allocation7 + $0x18] sm:$0xff]
    %v1115 = vld [vmem:[#allocation7 + $0x20] sm:$0xff]
    %v1116 = vld [vmem:[#allocation7 + $0x28] sm:$0xff]
    %v1117 = vld [vmem:[#allocation7 + $0x30] sm:$0xff]
    %v1118 = vld [vmem:[#allocation7 + $0x38] sm:$0xff]
    %v1119 = vld [vmem:[#allocation7 + $0x40] sm:$0xff]
    %v1120 = vld [vmem:[#allocation7 + $0x48] sm:$0xff]
    %v1121 = vld [vmem:[#allocation7 + $0x50] sm:$0xff]
    %v1122 = vld [vmem:[#allocation7 + $0x58] sm:$0xff]
    %v1123 = vld [vmem:[#allocation7 + $0x60] sm:$0xff]
    %v1124 = vld [vmem:[#allocation7 + $0x68] sm:$0xff]
    %v1125 = vld [vmem:[#allocation7 + $0x70] sm:$0xff]
    %v1126 = vld [vmem:[#allocation7 + $0x78] sm:$0xff]
    %v1127 = vld [vmem:[#allocation8] sm:$0x1]
    %v1129 = vperm.slane %v1127, 0
    %1131 = vmatpush.msra.mxu0 %v1126
    %1132 = vmatpush.msra.mxu0 %v1125
    %1133 = vmatpush.msra.mxu0 %v1124
    %1134 = vmatpush.msra.mxu0 %v1123
    %1135 = vmatpush.msra.mxu0 %v1122
    %1136 = vmatpush.msra.mxu0 %v1121
    %1137 = vmatpush.msra.mxu0 %v1120
    %1138 = vmatpush.msra.mxu0 %v1119
    %1139 = vmatpush.msra.mxu0 %v1118
    %1140 = vmatpush.msra.mxu0 %v1117
    %1141 = vmatpush.msra.mxu0 %v1116
    %1142 = vmatpush.msra.mxu0 %v1115
    %1143 = vmatpush.msra.mxu0 %v1114
    %1144 = vmatpush.msra.mxu0 %v1113
    %1145 = vmatpush.msra.mxu0 %v1112
    %1146 = vmatpush.msra.mxu0 %v1111
    %1147 = vmatmul.f32.gmra.mxu0 %v1110
    %v1148 = vpop.f32.mrf.mxu0
    %v1149 = vadd.f32 %v1129, %v1148
    %1150 = vdwg.mxu0
    %v1151 = vmax.f32 %v1149, 0.0
    %v1152 = vld [vmem:[#allocation10] sm:$0xff]
    %v1153 = vld [vmem:[#allocation10 + $0x8] sm:$0xff]
    %v1154 = vld [vmem:[#allocation10 + $0x10] sm:$0xff]
    %v1155 = vld [vmem:[#allocation10 + $0x18] sm:$0xff]
    %v1156 = vld [vmem:[#allocation10 + $0x20] sm:$0xff]
    %v1157 = vld [vmem:[#allocation10 + $0x28] sm:$0xff]
    %v1158 = vld [vmem:[#allocation10 + $0x30] sm:$0xff]
    %v1159 = vld [vmem:[#allocation10 + $0x38] sm:$0xff]
    %v1160 = vld [vmem:[#allocation10 + $0x40] sm:$0xff]
    %v1161 = vld [vmem:[#allocation10 + $0x48] sm:$0xff]
    %v1162 = vld [vmem:[#allocation10 + $0x50] sm:$0xff]
    %v1163 = vld [vmem:[#allocation10 + $0x58] sm:$0xff]
    %v1164 = vld [vmem:[#allocation10 + $0x60] sm:$0xff]
    %v1165 = vld [vmem:[#allocation10 + $0x68] sm:$0xff]
    %v1166 = vld [vmem:[#allocation10 + $0x70] sm:$0xff]
    %v1167 = vld [vmem:[#allocation10 + $0x78] sm:$0xff]
    %v1168 = vld [vmem:[#allocation11] sm:$0x1]
    %v1170 = vperm.slane %v1168, 0
    %1172 = vmatpush.msra.mxu0 %v1167
    %1173 = vmatpush.msra.mxu0 %v1166
    %1174 = vmatpush.msra.mxu0 %v1165
    %1175 = vmatpush.msra.mxu0 %v1164
    %1176 = vmatpush.msra.mxu0 %v1163
    %1177 = vmatpush.msra.mxu0 %v1162
    %1178 = vmatpush.msra.mxu0 %v1161
    %1179 = vmatpush.msra.mxu0 %v1160
    %1180 = vmatpush.msra.mxu0 %v1159
    %1181 = vmatpush.msra.mxu0 %v1158
    %1182 = vmatpush.msra.mxu0 %v1157
    %1183 = vmatpush.msra.mxu0 %v1156
    %1184 = vmatpush.msra.mxu0 %v1155
    %1185 = vmatpush.msra.mxu0 %v1154
    %1186 = vmatpush.msra.mxu0 %v1153
    %1187 = vmatpush.msra.mxu0 %v1152
    %1188 = vmatmul.f32.gmra.mxu0 %v1151
    %v1189 = vpop.f32.mrf.mxu0
    %v1190 = vadd.f32 %v1170, %v1189
    %1191 = vdwg.mxu0
    %1192 = vst [vmem:[#allocation13] sm:$0xff] %v1190
    // Predicated region
    $region54: #{boringnet_forward.1} parent=1 // pred_check
      _
    $region55: #{boringnet_forward.1} parent=1 // pred_check_branch
      %1194 = sbr.rel (0) target = $region57
    $region56: #{boringnet_forward.1} parent=1 // pred_region
      %1196 = vsyncadd [#allocation4], 96
      %s1197 = sshll.u32 [#allocation13], 4
      %s1198 = int_to_ptr.vmem [resolvable:$true] %s1197
      %s1199 = sshll.u32 %s7, 4
      %s1200 = int_to_ptr.hbm [resolvable:$true] %s1199
      %1205 = dma.vmem_to_hbm [thread:$0]  %s1198, 32, %s1200, [#allocation4], 32, 32, 2
    $region57: #{boringnet_forward.1} parent=1 // pred_fallthru
      _
    // Predicated region
    $region58: #{boringnet_forward.1} parent=1 // pred_check
      _
    $region59: #{boringnet_forward.1} parent=1 // pred_check_branch
      %1207 = sbr.rel (0) target = $region61
    $region60: #{boringnet_forward.1} parent=1 // pred_region
      %1209 = dma.done [#allocation4], 128
    $region61: #{boringnet_forward.1} parent=1 // pred_fallthru
      _
    %1210 = vsyncpa [#allocation3], 1
    %1211 = vsyncpa [#allocation6], 1
    %1212 = vsyncpa [#allocation9], 1
    %1213 = vsyncpa [#allocation12], 1
    %1214 = vsyncpa [#allocation4], 1

</llo_original>
